<compile_context>
chip_gen: v7x
topology: tpu7x:2x2x1
jax: 0.10.0
libtpu: 0.0.40
codegen_flags: <defaults>
</compile_context>

<pallas_src>
import jax
import jax.numpy as jnp
from jax.experimental import pallas as pl
from jax.experimental.pallas import tpu as pltpu


def _cs_se_kernel(chan_ref, wsp_ref, bsp_ref, x_ref, o_ref):
    # chan_ref: (1, C, 1)  = sigmoid(fc2(relu(fc1(mean(x))))) * 0.5 (per batch)
    # wsp_ref : (C, 1)     = 1x1x1 conv weight
    # bsp_ref : (1,) SMEM  = conv bias
    # x_ref   : (1, C, S_TILE)
    x = x_ref[0]                                                    # (C, S_TILE)

    # ---- spatial SE (sSE): 1x1x1 conv over channels on the VPU/XLU ----
    s = jnp.sum(wsp_ref[...] * x, axis=0, keepdims=True) + bsp_ref[0]   # (1, S_TILE)
    spatial_half = jax.nn.sigmoid(s) * 0.5                          # (1, S_TILE)

    # ---- fuse: (cSE(x) + sSE(x)) / 2 = x * (chan*0.5 + spatial*0.5) ----
    scale = chan_ref[0] + spatial_half                              # (C,1)+(1,S)->(C,S)
    o_ref[0] = (x * scale).astype(o_ref.dtype)


def channel_spatial_se_3d(x, w1, b1, w2, b2, wsp, bsp):
    """x: (B, C, D, H, W) float32. Params:
       w1 (C, Cr), b1 (1, Cr), w2 (Cr, C), b2 (1, C)  -- fc1/fc2 (transposed)
       wsp (1, C), bsp (1, 1)                         -- 1x1x1 conv
       Returns (B, C, D, H, W)."""
    B, C, D, H, W = x.shape
    S = D * H * W
    x_flat = x.reshape(B, C, S)

    # ---- channel SE branch, hoisted to plain JAX (tiny: O(B*C*Cr)) ----
    z = jnp.mean(x_flat, axis=-1)                         # (B, C) global avg pool
    h = jax.nn.relu(z @ w1 + b1)                          # (B, Cr)
    chan_scale = jax.nn.sigmoid(h @ w2 + b2)              # (B, C)
    chan_half = (chan_scale * 0.5).reshape(B, C, 1)       # 0.5 folded in

    wsp_col = wsp.reshape(C, 1)                           # conv weight as column
    bsp_s = bsp.reshape(1)                                # scalar bias -> SMEM

    # ---- S-tiling: lane-dense tiles, <= ~4 MiB per x block ----
    LANE = 128
    itemsize = jnp.dtype(x.dtype).itemsize
    target_block_bytes = 4 * 1024 * 1024
    s_tile = (target_block_bytes // (C * itemsize)) // LANE * LANE
    s_tile = max(LANE, min(s_tile, 32768))
    s_tile = min(s_tile, pl.cdiv(S, LANE) * LANE)         # don't exceed (padded) S

    num_s = pl.cdiv(S, s_tile)
    S_pad = num_s * s_tile
    if S_pad != S:
        x_flat = jnp.pad(x_flat, ((0, 0), (0, 0), (0, S_pad - S)))

    out_flat = pl.pallas_call(
        _cs_se_kernel,
        out_shape=jax.ShapeDtypeStruct((B, C, S_pad), x.dtype),
        grid_spec=pltpu.PrefetchScalarGridSpec(
            num_scalar_prefetch=0,
            grid=(B, num_s),
            in_specs=[
                pl.BlockSpec((1, C, 1), lambda b, s: (b, 0, 0)),       # chan_half
                pl.BlockSpec((C, 1), lambda b, s: (0, 0)),             # conv weight
                pl.BlockSpec(memory_space=pltpu.MemorySpace.SMEM),     # conv bias
                pl.BlockSpec((1, C, s_tile), lambda b, s: (b, 0, s)),  # x tile
            ],
            out_specs=pl.BlockSpec((1, C, s_tile), lambda b, s: (b, 0, s)),
        ),
        compiler_params=pltpu.CompilerParams(
            dimension_semantics=("parallel", "parallel")),
    )(chan_half, wsp_col, bsp_s, x_flat)

    if S_pad != S:
        out_flat = out_flat[:, :, :S]
    return out_flat.reshape(B, C, D, H, W)


def _reference(x, w1, b1, w2, b2, wsp, bsp):
    """Plain-JAX reference mirroring the PyTorch forward."""
    # cSE
    z = jnp.mean(x, axis=(2, 3, 4))                       # (B, C)
    h = jax.nn.relu(z @ w1 + b1)                          # (B, Cr)
    chan = jax.nn.sigmoid(h @ w2 + b2)                    # (B, C)
    cse = x * chan[:, :, None, None, None]
    # sSE
    sp = jnp.einsum("bcdhw,c->bdhw", x, wsp[0]) + bsp[0, 0]
    sse = x * jax.nn.sigmoid(sp)[:, None, :, :, :]
    return (cse + sse) / 2.0


if __name__ == "__main__":
    B, C, D, H, W = 2, 4, 8, 8, 8
    reduction_ratio = 2
    Cr = C // reduction_ratio

    key = jax.random.PRNGKey(0)
    kx, k1, k2, k3, k4, k5, k6 = jax.random.split(key, 7)

    x = jax.random.normal(kx, (B, C, D, H, W), dtype=jnp.float32)

    # Deterministic parameter init (shapes match nn.Linear / nn.Conv3d(1x1x1)).
    w1 = jax.random.normal(k1, (C, Cr), dtype=jnp.float32) * 0.5   # fc1.weight^T
    b1 = jax.random.normal(k2, (1, Cr), dtype=jnp.float32) * 0.1   # fc1.bias
    w2 = jax.random.normal(k3, (Cr, C), dtype=jnp.float32) * 0.5   # fc2.weight^T
    b2 = jax.random.normal(k4, (1, C), dtype=jnp.float32) * 0.1    # fc2.bias
    wsp = jax.random.normal(k5, (1, C), dtype=jnp.float32) * 0.5   # conv.weight (1,C,1,1,1)
    bsp = jax.random.normal(k6, (1, 1), dtype=jnp.float32) * 0.1   # conv.bias

    out = channel_spatial_se_3d(x, w1, b1, w2, b2, wsp, bsp)
    out = jax.block_until_ready(out)

    ref = _reference(x, w1, b1, w2, b2, wsp, bsp)
    assert out.shape == (B, C, D, H, W)
    assert jnp.allclose(out, ref, atol=1e-5, rtol=1e-5), "mismatch vs reference"

    # TODO(synk): optional bf16 storage of x/out (f32 math inside) would ~halve
    # HBM traffic on this bandwidth-bound op; kept f32 to match module semantics.
    print("KERNEL_OK")
</pallas_src>

<mosaic_0001>
module attributes {stable_mosaic.version = 11 : i64} {
  func.func @_cs_se_kernel(%arg0: i32, %arg1: i32, %arg2: memref<1x4x1xf32, #tpu.memory_space<vmem>>, %arg3: memref<4x1xf32, #tpu.memory_space<vmem>>, %arg4: memref<1xf32, #tpu.memory_space<smem>>, %arg5: memref<1x4x512xf32, #tpu.memory_space<vmem>>, %arg6: memref<1x4x512xf32, #tpu.memory_space<vmem>>) attributes {dimension_semantics = [#tpu.dimension_semantics<parallel>, #tpu.dimension_semantics<parallel>], iteration_bounds = array<i64: 2, 1>, scalar_prefetch = 0 : i64, scratch_operands = 0 : i64, tpu.core_type = #tpu.core_type<tc>, window_params = [{transform_indices = @transform_0, window_bounds = array<i64: 1, 4, 1>}, {pipeline_mode = #tpu.pipeline_mode<synchronous>, transform_indices = @transform_1, window_bounds = array<i64: 4, 1>}, {transform_indices = @transform_2, window_bounds = array<i64: 1>}, {transform_indices = @transform_3, window_bounds = array<i64: 1, 4, 512>}, {transform_indices = @transform_4, window_bounds = array<i64: 1, 4, 512>}]} {
    %c0 = arith.constant 0 : index
    %c0_0 = arith.constant 0 : index
    %c0_1 = arith.constant 0 : index
    %0 = vector.load %arg5[%c0, %c0_0, %c0_1] : memref<1x4x512xf32, #tpu.memory_space<vmem>>, vector<1x4x512xf32>
    %1 = vector.shape_cast %0 : vector<1x4x512xf32> to vector<4x512xf32>
    %c0_2 = arith.constant 0 : index
    %c0_3 = arith.constant 0 : index
    %2 = vector.load %arg3[%c0_2, %c0_3] : memref<4x1xf32, #tpu.memory_space<vmem>>, vector<4x1xf32>
    %3 = vector.broadcast %2 : vector<4x1xf32> to vector<4x512xf32>
    %4 = arith.mulf %3, %1 : vector<4x512xf32>
    %cst = arith.constant dense<0.000000e+00> : vector<512xf32>
    %5 = vector.multi_reduction <add>, %4, %cst [0] : vector<4x512xf32> to vector<512xf32>
    %6 = vector.shape_cast %5 : vector<512xf32> to vector<1x512xf32>
    %c0_4 = arith.constant 0 : index
    %7 = memref.load %arg4[%c0_4] : memref<1xf32, #tpu.memory_space<smem>>
    %8 = vector.broadcast %7 : f32 to vector<1x512xf32>
    %9 = arith.addf %6, %8 : vector<1x512xf32>
    %10 = arith.negf %9 : vector<1x512xf32>
    %11 = math.exp %10 : vector<1x512xf32>
    %cst_5 = arith.constant 1.000000e+00 : f32
    %12 = vector.broadcast %cst_5 : f32 to vector<1x512xf32>
    %13 = arith.addf %12, %11 : vector<1x512xf32>
    %14 = arith.divf %12, %13 : vector<1x512xf32>
    %cst_6 = arith.constant 5.000000e-01 : f32
    %15 = vector.broadcast %cst_6 : f32 to vector<1x512xf32>
    %16 = arith.mulf %14, %15 : vector<1x512xf32>
    %c0_7 = arith.constant 0 : index
    %c0_8 = arith.constant 0 : index
    %c0_9 = arith.constant 0 : index
    %17 = vector.load %arg2[%c0_7, %c0_8, %c0_9] : memref<1x4x1xf32, #tpu.memory_space<vmem>>, vector<1x4x1xf32>
    %18 = vector.shape_cast %17 : vector<1x4x1xf32> to vector<4x1xf32>
    %19 = vector.broadcast %18 : vector<4x1xf32> to vector<4x512xf32>
    %20 = vector.broadcast %16 : vector<1x512xf32> to vector<4x512xf32>
    %21 = arith.addf %19, %20 : vector<4x512xf32>
    %22 = arith.mulf %1, %21 : vector<4x512xf32>
    %c0_10 = arith.constant 0 : index
    %c0_11 = arith.constant 0 : index
    %c0_12 = arith.constant 0 : index
    %23 = vector.load %arg6[%c0_10, %c0_11, %c0_12] : memref<1x4x512xf32, #tpu.memory_space<vmem>>, vector<1x4x512xf32>
    %24 = vector.shape_cast %23 : vector<1x4x512xf32> to vector<4x512xf32>
    %25 = vector.shape_cast %22 : vector<4x512xf32> to vector<1x4x512xf32>
    tpu.vector_store %arg6[%c0_10, %c0_11, %c0_12], %25 {strides = array<i32>} : memref<1x4x512xf32, #tpu.memory_space<vmem>>, vector<1x4x512xf32>,
    return
  }
  func.func @transform_0(%arg0: i32, %arg1: i32) -> (i32, i32, i32) {
    %c0_i32 = arith.constant 0 : i32
    %c0_i32_0 = arith.constant 0 : i32
    %c0_i32_1 = arith.constant 0 : i32
    return %arg0, %c0_i32, %c0_i32_0 : i32, i32, i32
  }
  func.func @transform_1(%arg0: i32, %arg1: i32) -> (i32, i32) {
    %c0_i32 = arith.constant 0 : i32
    %c0_i32_0 = arith.constant 0 : i32
    %c0_i32_1 = arith.constant 0 : i32
    return %c0_i32, %c0_i32_0 : i32, i32
  }
  func.func @transform_2(%arg0: i32, %arg1: i32) -> i32 {
    %c0_i32 = arith.constant 0 : i32
    %c0_i32_0 = arith.constant 0 : i32
    return %c0_i32 : i32
  }
  func.func @transform_3(%arg0: i32, %arg1: i32) -> (i32, i32, i32) {
    %c0_i32 = arith.constant 0 : i32
    %c0_i32_0 = arith.constant 0 : i32
    return %arg0, %c0_i32, %arg1 : i32, i32, i32
  }
  func.func @transform_4(%arg0: i32, %arg1: i32) -> (i32, i32, i32) {
    %c0_i32 = arith.constant 0 : i32
    %c0_i32_0 = arith.constant 0 : i32
    return %arg0, %c0_i32, %arg1 : i32, i32, i32
  }
}

</mosaic_0001>

<llo_original>
// kernel: tpu_custom_call.1
$region0: #{tpu_custom_call.1}
  #allocation0 [shape = 'u32[]', space=smem, size = 0x4, offset = 0x4, fixed_abs, tag = 'smem constant byte address 0x4 - core index']
  #allocation1 [shape = 'u32[144,128]{1,0:T(1,128)}', space=vmem, size = 0x12000, scoped, tag = 'internal scratch']
  #allocation2 [shape = 'f32[1]{0:T(128)S(6)}', space=smem, size = 0x200, scoped, tag = 'scoped memory for tpu_custom_call.1']
  %s0 = inlined_call_operand.vmem [shape: f32[2,4,1], index: 0, kind: input, shape index: {}]
  %s1 = inlined_call_operand.vmem [shape: f32[4,1], index: 1, kind: input, shape index: {}]
  %s2 = inlined_call_operand.<no memory space> [shape: f32[1], index: 2, kind: input, shape index: {}]
  %s3 = inlined_call_operand.hbm [shape: f32[2,4,512], index: 3, kind: input, shape index: {}]
  %s4 = inlined_call_operand.hbm [shape: f32[2,4,512], index: 4, kind: output, shape index: {}]
  %s5 = sld [smem:[#allocation0]]
  $region53: #{tpu_custom_call.1} parent=0
    _
  %s7 = ssub.s32 1, %s5
  %s8 = scalar_select 0, %s7, %s5
  %9 = sst [smem:[#allocation2]] %s2
  $region1: #{tpu_custom_call.1} parent=0
    #allocation3 [shape = 'u8[16384]{0}', space=vmem, size = 0x4000, scoped, tag = 'input window, operand 3']
    #allocation4 [shape = 's32[2]{0}', space=sflag, size = 0x8, scoped, tag = 'scoped memory for tpu_custom_call.1']
    #allocation5 [shape = 's32[2]{0}', space=sflag, size = 0x8, scoped, tag = 'scoped memory for tpu_custom_call.1']
    #allocation6 [shape = 'u8[16384]{0}', space=vmem, size = 0x4000, scoped, tag = 'output window, operand 0']
    %10 = vsyncpa [#allocation4], 0
    %s11 = scalar_lea.sflag [#allocation4], 1
    %12 = vsyncpa %s11, 0
    %13 = vsyncpa [#allocation5], 0
    %s14 = scalar_lea.sflag [#allocation5], 1
    %15 = vsyncpa %s14, 0
    loop: start=0, step=1, limit=4
    $region2: #{tpu_custom_call.1} parent=1 // loop_pre_header
      _
    $region3: #{tpu_custom_call.1} parent=1 // loop_header
      %s17 = sphi 0, %s21
      %p18 = scmp.ge.s32.totalorder %s17, 4
      %s24 = sphi 0, %s36
      %s25 = sphi 0, %s32
      %s26 = sphi 0, %s24
      %s27 = sphi 0, %s25
      %s28 = sphi 0, %s26
      %s29 = sphi 0, %s27
      %s39 = sphi 0, %s41
      %s42 = sphi 0, %s39
      %s43 = sphi 0, %s42
      %s59 = sphi 0, %s43
      %s63 = sphi 0, %s63
      %s65 = sphi 0, %s63
      %s66 = sphi 0, %s65
      %s80 = sphi 0, %s66
      %s84 = sphi 0, %s84
      %s86 = sphi 0, %s84
      %s87 = sphi 0, %s86
      %s101 = sphi 0, %s87
      %s109 = sphi 0, %s111
      %s112 = sphi 0, %s109
      %s113 = sphi 0, %s112
      %s129 = sphi 0, %s113
      %s137 = sphi 0, %s139
      %s140 = sphi 0, %s137
      %s141 = sphi 0, %s140
      %s157 = sphi 0, %s141
    $region4: #{tpu_custom_call.1} parent=1 // loop_header_branch
      %20 = sbr.rel (%p18) target = $region8
    $region5: #{tpu_custom_call.1} parent=1 // loop_body
      %s22 = ssub.s32 %s17, 1
      %s23 = ssub.s32 %s17, 2
      %s30 = sadd.s32 1, %s25
      %p31 = scmp.ge.s32.totalorder %s30, 1
      %s32 = scalar_select %p31, 0, %s30
      %s33 = sadd.s32 1, %s24
      %s34 = scalar_select %p31, %s33, %s24
      %p35 = scmp.ge.s32.totalorder %s34, 2
      %s36 = scalar_select %p35, 0, %s34
      %s37 = ssub.s32 %s24, %s36
      %p38 = scmp.eq.s32.totalorder %s37, 0
      %s40 = sadd.s32 %s39, 1
      %s41 = scalar_select %p38, %s39, %s40
      %p44 = pneg %p38
      %p45 = scmp.eq.s32.totalorder %s17, 1
      %p46 = por %p44, %p45
      %p47 = scmp.ne.s32.totalorder %s39, %s42
      %p48 = scmp.eq.s32.totalorder %s17, 0
      %p49 = por %p47, %p48
      %p50 = scmp.ne.s32.totalorder %s39, %s42
      %p51 = scmp.eq.s32.totalorder %s22, 1
      %p52 = por %p50, %p51
      %p53 = scmp.ne.s32.totalorder %s42, %s43
      %p54 = scmp.eq.s32.totalorder %s22, 0
      %p55 = por %p53, %p54
      %p56 = scmp.ne.s32.totalorder %s42, %s43
      %p57 = scmp.eq.s32.totalorder %s23, 1
      %p58 = por %p56, %p57
      %p60 = scmp.ne.s32.totalorder %s43, %s59
      %p61 = scmp.eq.s32.totalorder %s23, 0
      %p62 = por %p60, %p61
      %s64 = sadd.s32 %s63, 1
      %p67 = scmp.eq.s32.totalorder %s17, 1
      %p68 = scmp.ne.s32.totalorder %s63, %s65
      %p69 = scmp.eq.s32.totalorder %s17, 0
      %p70 = por %p68, %p69
      %p71 = scmp.ne.s32.totalorder %s63, %s65
      %p72 = scmp.eq.s32.totalorder %s22, 1
      %p73 = por %p71, %p72
      %p74 = scmp.ne.s32.totalorder %s65, %s66
      %p75 = scmp.eq.s32.totalorder %s22, 0
      %p76 = por %p74, %p75
      %p77 = scmp.ne.s32.totalorder %s65, %s66
      %p78 = scmp.eq.s32.totalorder %s23, 1
      %p79 = por %p77, %p78
      %p81 = scmp.ne.s32.totalorder %s66, %s80
      %p82 = scmp.eq.s32.totalorder %s23, 0
      %p83 = por %p81, %p82
      %s85 = sadd.s32 %s84, 1
      %p88 = scmp.eq.s32.totalorder %s17, 1
      %p89 = scmp.ne.s32.totalorder %s84, %s86
      %p90 = scmp.eq.s32.totalorder %s17, 0
      %p91 = por %p89, %p90
      %p92 = scmp.ne.s32.totalorder %s84, %s86
      %p93 = scmp.eq.s32.totalorder %s22, 1
      %p94 = por %p92, %p93
      %p95 = scmp.ne.s32.totalorder %s86, %s87
      %p96 = scmp.eq.s32.totalorder %s22, 0
      %p97 = por %p95, %p96
      %p98 = scmp.ne.s32.totalorder %s86, %s87
      %p99 = scmp.eq.s32.totalorder %s23, 1
      %p100 = por %p98, %p99
      %p102 = scmp.ne.s32.totalorder %s87, %s101
      %p103 = scmp.eq.s32.totalorder %s23, 0
      %p104 = por %p102, %p103
      %s105 = ssub.s32 %s24, %s36
      %s106 = ssub.s32 %s25, %s32
      %s107 = sor.u32 %s105, %s106
      %p108 = scmp.eq.s32.totalorder %s107, 0
      %s110 = sadd.s32 %s109, 1
      %s111 = scalar_select %p108, %s109, %s110
      %p114 = pneg %p108
      %p115 = scmp.eq.s32.totalorder %s17, 1
      %p116 = por %p114, %p115
      %p117 = scmp.ne.s32.totalorder %s109, %s112
      %p118 = scmp.eq.s32.totalorder %s17, 0
      %p119 = por %p117, %p118
      %p120 = scmp.ne.s32.totalorder %s109, %s112
      %p121 = scmp.eq.s32.totalorder %s22, 1
      %p122 = por %p120, %p121
      %p123 = scmp.ne.s32.totalorder %s112, %s113
      %p124 = scmp.eq.s32.totalorder %s22, 0
      %p125 = por %p123, %p124
      %p126 = scmp.ne.s32.totalorder %s112, %s113
      %p127 = scmp.eq.s32.totalorder %s23, 1
      %p128 = por %p126, %p127
      %p130 = scmp.ne.s32.totalorder %s113, %s129
      %p131 = scmp.eq.s32.totalorder %s23, 0
      %p132 = por %p130, %p131
      %s133 = ssub.s32 %s24, %s36
      %s134 = ssub.s32 %s25, %s32
      %s135 = sor.u32 %s133, %s134
      %p136 = scmp.eq.s32.totalorder %s135, 0
      %s138 = sadd.s32 %s137, 1
      %s139 = scalar_select %p136, %s137, %s138
      %p142 = pneg %p136
      %p143 = scmp.eq.s32.totalorder %s17, 1
      %p144 = por %p142, %p143
      %p145 = scmp.ne.s32.totalorder %s137, %s140
      %p146 = scmp.eq.s32.totalorder %s17, 0
      %p147 = por %p145, %p146
      %p148 = scmp.ne.s32.totalorder %s137, %s140
      %p149 = scmp.eq.s32.totalorder %s22, 1
      %p150 = por %p148, %p149
      %p151 = scmp.ne.s32.totalorder %s140, %s141
      %p152 = scmp.eq.s32.totalorder %s22, 0
      %p153 = por %p151, %p152
      %p154 = scmp.ne.s32.totalorder %s140, %s141
      %p155 = scmp.eq.s32.totalorder %s23, 1
      %p156 = por %p154, %p155
      %p158 = scmp.ne.s32.totalorder %s141, %s157
      %p159 = scmp.eq.s32.totalorder %s23, 0
      %p160 = por %p158, %p159
      %p161 = scmp.le.s32.totalorder 1, %s17
      %p162 = scmp.lt.s32.totalorder %s17, 3
      %p163 = pnand %p161, %p162
      %p164 = pneg %p163
      // Predicated region
      $region9: #{tpu_custom_call.1} parent=5 // pred_check
        _
      $region10: #{tpu_custom_call.1} parent=5 // pred_check_branch
        %166 = sbr.rel (%p163) target = $region12
      $region11: #{tpu_custom_call.1} parent=5 // pred_region
        %s167 = ssub.s32 %s17, 1
        // Predicated region
        $region13: #{tpu_custom_call.1} parent=11 // pred_check
          %p168 = pneg %p76
        $region14: #{tpu_custom_call.1} parent=11 // pred_check_branch
          %170 = sbr.rel (%p168) target = $region16
        $region15: #{tpu_custom_call.1} parent=11 // pred_region
          _
        $region16: #{tpu_custom_call.1} parent=11 // pred_fallthru
          _
        // Predicated region
        $region17: #{tpu_custom_call.1} parent=11 // pred_check
          %p171 = pneg %p97
        $region18: #{tpu_custom_call.1} parent=11 // pred_check_branch
          %173 = sbr.rel (%p171) target = $region20
        $region19: #{tpu_custom_call.1} parent=11 // pred_region
          _
        $region20: #{tpu_custom_call.1} parent=11 // pred_fallthru
          _
      $region12: #{tpu_custom_call.1} parent=5 // pred_fallthru
        _
      %p174 = scmp.lt.s32.totalorder %s17, 2
      // Predicated region
      $region21: #{tpu_custom_call.1} parent=5 // pred_check
        %p175 = pneg %p174
      $region22: #{tpu_custom_call.1} parent=5 // pred_check_branch
        %177 = sbr.rel (%p175) target = $region24
      $region23: #{tpu_custom_call.1} parent=5 // pred_region
        // Predicated region
        $region25: #{tpu_custom_call.1} parent=23 // pred_check
          %p178 = pneg %p49
        $region26: #{tpu_custom_call.1} parent=23 // pred_check_branch
          %180 = sbr.rel (%p178) target = $region28
        $region27: #{tpu_custom_call.1} parent=23 // pred_region
          %p181 = scmp.lt.s32.totalorder %s24, 1
          %s182 = scalar_select %p181, %s24, 1
          %s183 = smul.addr %s182, 4
          %s184 = scalar_lea.vmem %s0, %s183
        $region28: #{tpu_custom_call.1} parent=23 // pred_fallthru
          _
        // Predicated region
        $region29: #{tpu_custom_call.1} parent=23 // pred_check
          %p185 = pneg %p119
        $region30: #{tpu_custom_call.1} parent=23 // pred_check_branch
          %187 = sbr.rel (%p185) target = $region32
        $region31: #{tpu_custom_call.1} parent=23 // pred_region
          %s188 = sand.u32 %s109, 1
          %s189 = scalar_lea.sflag [#allocation4], %s188
          %s190 = sand.u32 %s109, 1
          %s191 = smul.addr %s190, 16
          %s192 = scalar_lea.vmem [#allocation3], %s191
          %s193 = smul.u32 4, %s25
          %s195 = ssub.s32 256, 256
          %196 = vsyncadd %s189, %s195
          %s197 = smul.addr %s24, 4
          %s198 = sadd.s32 %s193, %s197
          %s199 = smul.addr %s198, 64
          %s200 = scalar_lea.hbm %s3, %s199
          %s202 = sshll.u32 %s192, 4
          %s203 = int_to_ptr.vmem [resolvable:$true] %s202
          %205 = dma.hbm_to_vmem [thread:$0]  %s200, 256, %s203, %s189
        $region32: #{tpu_custom_call.1} parent=23 // pred_fallthru
          _
      $region24: #{tpu_custom_call.1} parent=5 // pred_fallthru
        _
      %p206 = scmp.le.s32.totalorder 1, %s17
      %p207 = scmp.lt.s32.totalorder %s17, 3
      %p208 = pnand %p206, %p207
      %p209 = pneg %p208
      // Predicated region
      $region33: #{tpu_custom_call.1} parent=5 // pred_check
        _
      $region34: #{tpu_custom_call.1} parent=5 // pred_check_branch
        %211 = sbr.rel (%p208) target = $region36
      $region35: #{tpu_custom_call.1} parent=5 // pred_region
        %s212 = ssub.s32 %s17, 1
        %s213 = sand.u32 %s112, 1
        %s214 = scalar_lea.sflag [#allocation4], %s213
        %s215 = sand.u32 %s112, 1
        %s216 = smul.addr %s215, 16
        %s217 = scalar_lea.vmem [#allocation3], %s216
        // Predicated region
        $region37: #{tpu_custom_call.1} parent=35 // pred_check
          %p218 = pneg %p125
        $region38: #{tpu_custom_call.1} parent=35 // pred_check_branch
          %220 = sbr.rel (%p218) target = $region40
        $region39: #{tpu_custom_call.1} parent=35 // pred_region
          %221 = dma.done %s214, 256
        $region40: #{tpu_custom_call.1} parent=35 // pred_fallthru
          _
        %p222 = scmp.lt.s32.totalorder %s26, 1
        %s223 = scalar_select %p222, %s26, 1
        %s224 = smul.addr %s223, 4
        %s225 = scalar_lea.vmem %s0, %s224
        %p226 = pneg %p55
        %p227 = pneg %p52
        %p228 = pneg %p76
        %p229 = pneg %p73
        %p230 = pneg %p97
        %p231 = pneg %p94
        %s232 = sand.u32 %s112, 1
        %s233 = scalar_lea.sflag [#allocation4], %s232
        %s234 = sand.u32 %s112, 1
        %s235 = smul.addr %s234, 16
        %s236 = scalar_lea.vmem [#allocation3], %s235
        %p237 = pneg %p125
        %p238 = pneg %p122
        %p239 = pneg %p153
        %p240 = pneg %p150
        %s241 = sand.u32 %s140, 1
        %s242 = scalar_lea.sflag [#allocation5], %s241
        %s243 = sand.u32 %s140, 1
        %s244 = smul.addr %s243, 16
        %s245 = scalar_lea.vmem [#allocation6], %s244
        %p246 = scmp.lt.s32.totalorder %s26, 1
        %s247 = scalar_select %p246, %s26, 1
        %s248 = smul.addr %s247, 4
        %s249 = scalar_lea.vmem %s0, %s248
        %s250 = smul.u32 4, %s27
        %s251 = smul.u32 4, %s27
        %v252 = vld [vmem:[%s217] sm:$0xff]
        %v253 = vld [vmem:[%s217 + $0x8] sm:$0xff]
        %v254 = vld [vmem:[%s1] sm:$0xf]
        %256 = vset.pattern.permute.xlu0 0
        %257 = vperm.xlu0 %256, %v254
        %v258 = vpop.permute.xlu0 %257
        %v262 = vcombine.high %v252, %v252
        %v263 = vcombine.high %v253, %v253
        %v266 = vmul.f32 %v258, %v252
        %v267 = vmul.f32 %v258, %v262
        %v268 = vmul.f32 %v258, %v253
        %v269 = vmul.f32 %v258, %v263
        %vm270 = vcmask 1043456
        %v271 = vsel %vm270, %v266, 0.0
        %v272 = vrot.slane %v271, 4
        %v273 = vadd.f32 %v271, %v272
        %v274 = vrot.slane %v273, 2
        %v275 = vadd.f32 %v273, %v274
        %v276 = vrot.slane %v275, 1
        %v277 = vadd.f32 %v275, %v276
        %v278 = vsel %vm270, %v267, 0.0
        %v279 = vrot.slane %v278, 4
        %v280 = vadd.f32 %v278, %v279
        %v281 = vrot.slane %v280, 2
        %v282 = vadd.f32 %v280, %v281
        %v283 = vrot.slane %v282, 1
        %v284 = vadd.f32 %v282, %v283
        %v285 = vsel %vm270, %v268, 0.0
        %v286 = vrot.slane %v285, 4
        %v287 = vadd.f32 %v285, %v286
        %v288 = vrot.slane %v287, 2
        %v289 = vadd.f32 %v287, %v288
        %v290 = vrot.slane %v289, 1
        %v291 = vadd.f32 %v289, %v290
        %v292 = vsel %vm270, %v269, 0.0
        %v293 = vrot.slane %v292, 4
        %v294 = vadd.f32 %v292, %v293
        %v295 = vrot.slane %v294, 2
        %v296 = vadd.f32 %v294, %v295
        %v297 = vrot.slane %v296, 1
        %v298 = vadd.f32 %v296, %v297
        %s299 = sld [smem:[#allocation2]]
        %v300 = vstv %s299
        %v301 = vadd.f32 %v277, %v300
        %v302 = vadd.f32 %v284, %v300
        %v303 = vadd.f32 %v291, %v300
        %v304 = vadd.f32 %v298, %v300
        %v305 = vxor.u32 %v301, 2147483648
        %v306 = vxor.u32 %v302, 2147483648
        %v307 = vxor.u32 %v303, 2147483648
        %v308 = vxor.u32 %v304, 2147483648
        %v309 = vmul.f32 %v305, 1.442695
        %v310 = vpow.pop %v309
        %v311 = vmul.f32 %v306, 1.442695
        %v312 = vpow.pop %v311
        %v313 = vmul.f32 %v307, 1.442695
        %v314 = vpow.pop %v313
        %v315 = vmul.f32 %v308, 1.442695
        %v316 = vpow.pop %v315
        %v317 = vadd.f32 %v310, 1.0
        %v318 = vadd.f32 %v312, 1.0
        %v319 = vadd.f32 %v314, 1.0
        %v320 = vadd.f32 %v316, 1.0
        %v321 = vrcp.pop %v317
        %v322 = vmul.f32 1.0, %v321
        %v323 = vrcp.pop %v318
        %v324 = vmul.f32 1.0, %v323
        %v325 = vrcp.pop %v319
        %v326 = vmul.f32 1.0, %v325
        %v327 = vrcp.pop %v320
        %v328 = vmul.f32 1.0, %v327
        %v329 = vmul.f32 %v322, 0.5
        %v330 = vmul.f32 %v324, 0.5
        %v331 = vmul.f32 %v326, 0.5
        %v332 = vmul.f32 %v328, 0.5
        %v333 = vld [vmem:[%s249] sm:$0xf]
        %335 = vset.pattern.permute.xlu0 0
        %336 = vperm.xlu0 %335, %v333
        %v337 = vpop.permute.xlu0 %336
        %v339 = vadd.f32 %v337, %v329
        %v340 = vadd.f32 %v337, %v330
        %v341 = vadd.f32 %v337, %v331
        %v342 = vadd.f32 %v337, %v332
        %v347 = vcombine.low %v339, %v340
        %v348 = vcombine.low %v341, %v342
        %v351 = vmul.f32 %v252, %v347
        %v352 = vmul.f32 %v253, %v348
        %353 = vst [vmem:[%s245] sm:$0xff] %v351
        %354 = vst [vmem:[%s245 + $0x8] sm:$0xff] %v352
        %s355 = sand.u32 %s140, 1
        %s356 = scalar_lea.sflag [#allocation5], %s355
        %s357 = sand.u32 %s140, 1
        %s358 = smul.addr %s357, 16
        %s359 = scalar_lea.vmem [#allocation6], %s358
        // Predicated region
        $region41: #{tpu_custom_call.1} parent=35 // pred_check
          %p360 = pneg %p150
        $region42: #{tpu_custom_call.1} parent=35 // pred_check_branch
          %362 = sbr.rel (%p360) target = $region44
        $region43: #{tpu_custom_call.1} parent=35 // pred_region
          %s363 = smul.u32 4, %s27
          %s365 = ssub.s32 256, 256
          %366 = vsyncadd %s356, %s365
          %s367 = smul.addr %s26, 4
          %s368 = sadd.s32 %s363, %s367
          %s369 = smul.addr %s368, 64
          %s370 = scalar_lea.hbm %s4, %s369
          %s372 = sshll.u32 %s359, 4
          %s373 = int_to_ptr.vmem [resolvable:$true] %s372
          %375 = dma.vmem_to_hbm [thread:$0]  %s373, 256, %s370, %s356
        $region44: #{tpu_custom_call.1} parent=35 // pred_fallthru
          _
      $region36: #{tpu_custom_call.1} parent=5 // pred_fallthru
        _
      %p376 = scmp.le.s32.totalorder 2, %s17
      // Predicated region
      $region45: #{tpu_custom_call.1} parent=5 // pred_check
        %p377 = pneg %p376
      $region46: #{tpu_custom_call.1} parent=5 // pred_check_branch
        %379 = sbr.rel (%p377) target = $region48
      $region47: #{tpu_custom_call.1} parent=5 // pred_region
        %s380 = ssub.s32 %s17, 2
        // Predicated region
        $region49: #{tpu_custom_call.1} parent=47 // pred_check
          %p381 = pneg %p156
        $region50: #{tpu_custom_call.1} parent=47 // pred_check_branch
          %383 = sbr.rel (%p381) target = $region52
        $region51: #{tpu_custom_call.1} parent=47 // pred_region
          %s384 = sand.u32 %s141, 1
          %s385 = scalar_lea.sflag [#allocation5], %s384
          %s386 = sand.u32 %s141, 1
          %s387 = smul.addr %s386, 16
          %s388 = scalar_lea.vmem [#allocation6], %s387
          %389 = dma.done %s385, 256
        $region52: #{tpu_custom_call.1} parent=47 // pred_fallthru
          _
      $region48: #{tpu_custom_call.1} parent=5 // pred_fallthru
        _
    $region6: #{tpu_custom_call.1} parent=1 // loop_footer
      %s21 = sadd.s32 1, %s17
    $region7: #{tpu_custom_call.1} parent=1 // loop_footer_branch
      %16 = sbr.rel target = $region3
    $region8: #{tpu_custom_call.1} parent=1 // loop_exit
      _
    %390 = vsyncpa [#allocation4], 1
    %s391 = scalar_lea.sflag [#allocation4], 1
    %392 = vsyncpa %s391, 1
    %393 = vsyncpa [#allocation5], 1
    %s394 = scalar_lea.sflag [#allocation5], 1
    %395 = vsyncpa %s394, 1

</llo_original>
